<compile_context>
chip_gen: v6e
topology: v6e:2x2x1
jax: 0.10.0
libtpu: 0.0.40
codegen_flags: <defaults>
</compile_context>

<pallas_src>
import functools
import math

import jax
import jax.numpy as jnp
from jax import lax
from jax.experimental import pallas as pl
from jax.experimental.pallas import tpu as pltpu


def _round_up(x, m):
    return (x + m - 1) // m * m


def _psnr_kernel(x_ref, t_ref, o_ref, max_sc, ss_sc, *, n_valid, tn, needs_mask):
    """Accumulate per-row running max(input) and sum((input-target)^2).

    x_ref, t_ref : (TB, TN) VMEM tiles (native dtype, cast per-chunk to f32)
    o_ref        : (TB, 1) per-row PSNR, written only on the last lane step
    max_sc, ss_sc: (TB, 128) f32 scratch, persistent across the lane grid axis
    """
    k = pl.program_id(1)
    nk = pl.num_programs(1)
    tb = x_ref.shape[0]
    n_chunks = tn // 128

    @pl.when(k == 0)
    def _init():
        max_sc[...] = jnp.full(max_sc.shape, -jnp.inf, max_sc.dtype)
        ss_sc[...] = jnp.zeros(ss_sc.shape, ss_sc.dtype)

    if needs_mask:
        base_iota = lax.broadcasted_iota(jnp.int32, (tb, 128), 1)
        col0 = k * tn

    def chunk_body(c, carry):
        m, s = carry
        off = pl.multiple_of(c * 128, 128)
        xc = x_ref[:, pl.ds(off, 128)].astype(jnp.float32)
        tc = t_ref[:, pl.ds(off, 128)].astype(jnp.float32)
        dc = xc - tc
        if needs_mask:
            valid = (col0 + c * 128 + base_iota) < n_valid
            xc = jnp.where(valid, xc, -jnp.inf)
            dc = jnp.where(valid, dc, 0.0)
        return jnp.maximum(m, xc), s + dc * dc

    m, s = lax.fori_loop(
        0, n_chunks, chunk_body, (max_sc[...], ss_sc[...]),
        unroll=min(n_chunks, 8),
    )
    max_sc[...] = m
    ss_sc[...] = s

    @pl.when(k == nk - 1)
    def _finalize():
        # One cross-lane (XLU) reduce per batch tile, then EUP log10.
        row_max = jnp.max(max_sc[...], axis=1, keepdims=True)      # (TB, 1)
        row_ss = jnp.sum(ss_sc[...], axis=1, keepdims=True)        # (TB, 1)
        mse = row_ss * jnp.float32(1.0 / n_valid)
        o_ref[...] = 20.0 * jnp.log10(row_max) - 10.0 * jnp.log10(mse)


def psnr_loss(inp, tgt, reduction="mean"):
    """PSNRLoss(reduction).forward(input, target). Default 'mean' -> scalar f32."""
    assert inp.shape == tgt.shape, (inp.shape, tgt.shape)
    b = inp.shape[0]
    n = math.prod(inp.shape[1:])
    x = inp.reshape(b, n)
    t = tgt.reshape(b, n)

    itemsize = jnp.dtype(inp.dtype).itemsize

    # Batch tile: full batch unless it splits cleanly into 16-row tiles
    # (16 rows is layout-safe for both f32 and bf16 blocks).
    tb = 16 if (b % 16 == 0) else b

    # Lane tile: multiple of 128, ~1 MiB per input block so the 2-deep
    # pipeline (2 inputs x 2 buffers) stays ~4 MiB -- fits every generation's
    # scoped VMEM, including v7x's smaller 64 MiB physical VMEM.
    tn_cap = max(512, ((1 << 20) // (tb * itemsize)) // 128 * 128)
    tn = min(_round_up(n, 128), tn_cap)
    needs_mask = (n % tn) != 0

    grid = (b // tb, pl.cdiv(n, tn))

    kernel = functools.partial(
        _psnr_kernel, n_valid=n, tn=tn, needs_mask=needs_mask
    )

    psnr_rows = pl.pallas_call(
        kernel,
        out_shape=jax.ShapeDtypeStruct((b, 1), jnp.float32),
        grid=grid,
        in_specs=[
            pl.BlockSpec((tb, tn), lambda i, k: (i, k)),
            pl.BlockSpec((tb, tn), lambda i, k: (i, k)),
        ],
        out_specs=pl.BlockSpec((tb, 1), lambda i, k: (i, 0)),
        scratch_shapes=[
            pltpu.VMEM((tb, 128), jnp.float32),  # running per-row max
            pltpu.VMEM((tb, 128), jnp.float32),  # running per-row sum of squares
        ],
        compiler_params=pltpu.CompilerParams(
            dimension_semantics=("parallel", "arbitrary"),
            vmem_limit_bytes=32 * 1024 * 1024,
        ),
    )(x, t)

    psnrs = psnr_rows[:, 0]
    if reduction == "mean":
        return jnp.mean(psnrs)
    if reduction == "sum":
        return jnp.sum(psnrs)
    if reduction == "none":
        return psnrs
    raise ValueError(f"Reduction is either `mean`, `sum` or `none`. Got {reduction}.")


if __name__ == "__main__":
    key = jax.random.PRNGKey(0)
    k1, k2 = jax.random.split(key)

    # Small NCHW shapes consistent with an image-restoration target.
    shape = (2, 4, 16, 16)
    # Strictly positive values so log10(max) is finite.
    inp = jax.random.uniform(k1, shape, dtype=jnp.float32, minval=0.1, maxval=1.0)
    noise = 0.05 * jax.random.normal(k2, shape, dtype=jnp.float32)
    tgt = inp + noise

    result = psnr_loss(inp, tgt)
    result = jax.block_until_ready(result)

    # Pure-JAX reference (same semantics as batch_psnr, reduction='mean').
    b = shape[0]
    xv = inp.reshape(b, -1)
    tv = tgt.reshape(b, -1)
    ref = jnp.mean(
        20.0 * jnp.log10(jnp.max(xv, axis=1))
        - 10.0 * jnp.log10(jnp.mean((xv - tv) ** 2, axis=1))
    )
    assert jnp.allclose(result, ref, rtol=1e-5, atol=1e-5), (result, ref)

    print("KERNEL_OK")
</pallas_src>

<mosaic_0001>
module attributes {stable_mosaic.version = 11 : i64} {
  func.func @_psnr_kernel(%arg0: i32, %arg1: i32, %arg2: memref<2x1024xf32, #tpu.memory_space<vmem>>, %arg3: memref<2x1024xf32, #tpu.memory_space<vmem>>, %arg4: memref<2x1xf32, #tpu.memory_space<vmem>>, %arg5: memref<2x128xf32, #tpu.memory_space<vmem>>, %arg6: memref<2x128xf32, #tpu.memory_space<vmem>>) attributes {dimension_semantics = [#tpu.dimension_semantics<parallel>, #tpu.dimension_semantics<arbitrary>], iteration_bounds = array<i64: 1, 1>, scalar_prefetch = 0 : i64, scratch_operands = 2 : i64, tpu.core_type = #tpu.core_type<tc>, window_params = [{transform_indices = @transform_0, window_bounds = array<i64: 2, 1024>}, {transform_indices = @transform_1, window_bounds = array<i64: 2, 1024>}, {transform_indices = @transform_2, window_bounds = array<i64: 2, 1>}]} {
    %c0_i32 = arith.constant 0 : i32
    %0 = arith.cmpi eq, %arg1, %c0_i32 : i32
    %1 = arith.extui %0 : i1 to i32
    %c0_i32_0 = arith.constant 0 : i32
    %2 = arith.cmpi ne, %1, %c0_i32_0 : i32
    scf.if %2 {
      %cst = arith.constant 0xFF800000 : f32
      %90 = vector.broadcast %cst : f32 to vector<2x128xf32>
      %c0_34 = arith.constant 0 : index
      %c0_35 = arith.constant 0 : index
      %91 = vector.load %arg5[%c0_34, %c0_35] : memref<2x128xf32, #tpu.memory_space<vmem>>, vector<2x128xf32>
      tpu.vector_store %arg5[%c0_34, %c0_35], %90 {strides = array<i32>} : memref<2x128xf32, #tpu.memory_space<vmem>>, vector<2x128xf32>,
      %cst_36 = arith.constant 0.000000e+00 : f32
      %92 = vector.broadcast %cst_36 : f32 to vector<2x128xf32>
      %c0_37 = arith.constant 0 : index
      %c0_38 = arith.constant 0 : index
      %93 = vector.load %arg6[%c0_37, %c0_38] : memref<2x128xf32, #tpu.memory_space<vmem>>, vector<2x128xf32>
      tpu.vector_store %arg6[%c0_37, %c0_38], %92 {strides = array<i32>} : memref<2x128xf32, #tpu.memory_space<vmem>>, vector<2x128xf32>,
    } else {
    }
    %c0 = arith.constant 0 : index
    %c0_1 = arith.constant 0 : index
    %3 = vector.load %arg5[%c0, %c0_1] : memref<2x128xf32, #tpu.memory_space<vmem>>, vector<2x128xf32>
    %c0_2 = arith.constant 0 : index
    %c0_3 = arith.constant 0 : index
    %4 = vector.load %arg6[%c0_2, %c0_3] : memref<2x128xf32, #tpu.memory_space<vmem>>, vector<2x128xf32>
    %c0_i32_4 = arith.constant 0 : i32
    %c128_i32 = arith.constant 128 : i32
    %5 = arith.muli %c0_i32_4, %c128_i32 : i32
    %6 = tpu.assume_multiple %5, 128 : i32
    %c0_5 = arith.constant 0 : index
    %7 = arith.index_cast %6 : i32 to index
    %8 = vector.load %arg2[%c0_5, %7] : memref<2x1024xf32, #tpu.memory_space<vmem>>, vector<2x128xf32>
    %c0_6 = arith.constant 0 : index
    %9 = arith.index_cast %6 : i32 to index
    %10 = vector.load %arg3[%c0_6, %9] : memref<2x1024xf32, #tpu.memory_space<vmem>>, vector<2x128xf32>
    %11 = arith.subf %8, %10 : vector<2x128xf32>
    %12 = arith.maximumf %3, %8 : vector<2x128xf32>
    %13 = arith.mulf %11, %11 : vector<2x128xf32>
    %14 = arith.addf %4, %13 : vector<2x128xf32>
    %c1_i32 = arith.constant 1 : i32
    %c128_i32_7 = arith.constant 128 : i32
    %15 = arith.muli %c1_i32, %c128_i32_7 : i32
    %16 = tpu.assume_multiple %15, 128 : i32
    %c0_8 = arith.constant 0 : index
    %17 = arith.index_cast %16 : i32 to index
    %18 = vector.load %arg2[%c0_8, %17] : memref<2x1024xf32, #tpu.memory_space<vmem>>, vector<2x128xf32>
    %c0_9 = arith.constant 0 : index
    %19 = arith.index_cast %16 : i32 to index
    %20 = vector.load %arg3[%c0_9, %19] : memref<2x1024xf32, #tpu.memory_space<vmem>>, vector<2x128xf32>
    %21 = arith.subf %18, %20 : vector<2x128xf32>
    %22 = arith.maximumf %12, %18 : vector<2x128xf32>
    %23 = arith.mulf %21, %21 : vector<2x128xf32>
    %24 = arith.addf %14, %23 : vector<2x128xf32>
    %c2_i32 = arith.constant 2 : i32
    %c128_i32_10 = arith.constant 128 : i32
    %25 = arith.muli %c2_i32, %c128_i32_10 : i32
    %26 = tpu.assume_multiple %25, 128 : i32
    %c0_11 = arith.constant 0 : index
    %27 = arith.index_cast %26 : i32 to index
    %28 = vector.load %arg2[%c0_11, %27] : memref<2x1024xf32, #tpu.memory_space<vmem>>, vector<2x128xf32>
    %c0_12 = arith.constant 0 : index
    %29 = arith.index_cast %26 : i32 to index
    %30 = vector.load %arg3[%c0_12, %29] : memref<2x1024xf32, #tpu.memory_space<vmem>>, vector<2x128xf32>
    %31 = arith.subf %28, %30 : vector<2x128xf32>
    %32 = arith.maximumf %22, %28 : vector<2x128xf32>
    %33 = arith.mulf %31, %31 : vector<2x128xf32>
    %34 = arith.addf %24, %33 : vector<2x128xf32>
    %c3_i32 = arith.constant 3 : i32
    %c128_i32_13 = arith.constant 128 : i32
    %35 = arith.muli %c3_i32, %c128_i32_13 : i32
    %36 = tpu.assume_multiple %35, 128 : i32
    %c0_14 = arith.constant 0 : index
    %37 = arith.index_cast %36 : i32 to index
    %38 = vector.load %arg2[%c0_14, %37] : memref<2x1024xf32, #tpu.memory_space<vmem>>, vector<2x128xf32>
    %c0_15 = arith.constant 0 : index
    %39 = arith.index_cast %36 : i32 to index
    %40 = vector.load %arg3[%c0_15, %39] : memref<2x1024xf32, #tpu.memory_space<vmem>>, vector<2x128xf32>
    %41 = arith.subf %38, %40 : vector<2x128xf32>
    %42 = arith.maximumf %32, %38 : vector<2x128xf32>
    %43 = arith.mulf %41, %41 : vector<2x128xf32>
    %44 = arith.addf %34, %43 : vector<2x128xf32>
    %c4_i32 = arith.constant 4 : i32
    %c128_i32_16 = arith.constant 128 : i32
    %45 = arith.muli %c4_i32, %c128_i32_16 : i32
    %46 = tpu.assume_multiple %45, 128 : i32
    %c0_17 = arith.constant 0 : index
    %47 = arith.index_cast %46 : i32 to index
    %48 = vector.load %arg2[%c0_17, %47] : memref<2x1024xf32, #tpu.memory_space<vmem>>, vector<2x128xf32>
    %c0_18 = arith.constant 0 : index
    %49 = arith.index_cast %46 : i32 to index
    %50 = vector.load %arg3[%c0_18, %49] : memref<2x1024xf32, #tpu.memory_space<vmem>>, vector<2x128xf32>
    %51 = arith.subf %48, %50 : vector<2x128xf32>
    %52 = arith.maximumf %42, %48 : vector<2x128xf32>
    %53 = arith.mulf %51, %51 : vector<2x128xf32>
    %54 = arith.addf %44, %53 : vector<2x128xf32>
    %c5_i32 = arith.constant 5 : i32
    %c128_i32_19 = arith.constant 128 : i32
    %55 = arith.muli %c5_i32, %c128_i32_19 : i32
    %56 = tpu.assume_multiple %55, 128 : i32
    %c0_20 = arith.constant 0 : index
    %57 = arith.index_cast %56 : i32 to index
    %58 = vector.load %arg2[%c0_20, %57] : memref<2x1024xf32, #tpu.memory_space<vmem>>, vector<2x128xf32>
    %c0_21 = arith.constant 0 : index
    %59 = arith.index_cast %56 : i32 to index
    %60 = vector.load %arg3[%c0_21, %59] : memref<2x1024xf32, #tpu.memory_space<vmem>>, vector<2x128xf32>
    %61 = arith.subf %58, %60 : vector<2x128xf32>
    %62 = arith.maximumf %52, %58 : vector<2x128xf32>
    %63 = arith.mulf %61, %61 : vector<2x128xf32>
    %64 = arith.addf %54, %63 : vector<2x128xf32>
    %c6_i32 = arith.constant 6 : i32
    %c128_i32_22 = arith.constant 128 : i32
    %65 = arith.muli %c6_i32, %c128_i32_22 : i32
    %66 = tpu.assume_multiple %65, 128 : i32
    %c0_23 = arith.constant 0 : index
    %67 = arith.index_cast %66 : i32 to index
    %68 = vector.load %arg2[%c0_23, %67] : memref<2x1024xf32, #tpu.memory_space<vmem>>, vector<2x128xf32>
    %c0_24 = arith.constant 0 : index
    %69 = arith.index_cast %66 : i32 to index
    %70 = vector.load %arg3[%c0_24, %69] : memref<2x1024xf32, #tpu.memory_space<vmem>>, vector<2x128xf32>
    %71 = arith.subf %68, %70 : vector<2x128xf32>
    %72 = arith.maximumf %62, %68 : vector<2x128xf32>
    %73 = arith.mulf %71, %71 : vector<2x128xf32>
    %74 = arith.addf %64, %73 : vector<2x128xf32>
    %c7_i32 = arith.constant 7 : i32
    %c128_i32_25 = arith.constant 128 : i32
    %75 = arith.muli %c7_i32, %c128_i32_25 : i32
    %76 = tpu.assume_multiple %75, 128 : i32
    %c0_26 = arith.constant 0 : index
    %77 = arith.index_cast %76 : i32 to index
    %78 = vector.load %arg2[%c0_26, %77] : memref<2x1024xf32, #tpu.memory_space<vmem>>, vector<2x128xf32>
    %c0_27 = arith.constant 0 : index
    %79 = arith.index_cast %76 : i32 to index
    %80 = vector.load %arg3[%c0_27, %79] : memref<2x1024xf32, #tpu.memory_space<vmem>>, vector<2x128xf32>
    %81 = arith.subf %78, %80 : vector<2x128xf32>
    %82 = arith.maximumf %72, %78 : vector<2x128xf32>
    %83 = arith.mulf %81, %81 : vector<2x128xf32>
    %84 = arith.addf %74, %83 : vector<2x128xf32>
    %c8_i32 = arith.constant 8 : i32
    %c0_28 = arith.constant 0 : index
    %c0_29 = arith.constant 0 : index
    %85 = vector.load %arg5[%c0_28, %c0_29] : memref<2x128xf32, #tpu.memory_space<vmem>>, vector<2x128xf32>
    tpu.vector_store %arg5[%c0_28, %c0_29], %82 {strides = array<i32>} : memref<2x128xf32, #tpu.memory_space<vmem>>, vector<2x128xf32>,
    %c0_30 = arith.constant 0 : index
    %c0_31 = arith.constant 0 : index
    %86 = vector.load %arg6[%c0_30, %c0_31] : memref<2x128xf32, #tpu.memory_space<vmem>>, vector<2x128xf32>
    tpu.vector_store %arg6[%c0_30, %c0_31], %84 {strides = array<i32>} : memref<2x128xf32, #tpu.memory_space<vmem>>, vector<2x128xf32>,
    %c0_i32_32 = arith.constant 0 : i32
    %87 = arith.cmpi eq, %arg1, %c0_i32_32 : i32
    %88 = arith.extui %87 : i1 to i32
    %c0_i32_33 = arith.constant 0 : i32
    %89 = arith.cmpi ne, %88, %c0_i32_33 : i32
    scf.if %89 {
      %c0_34 = arith.constant 0 : index
      %c0_35 = arith.constant 0 : index
      %90 = vector.load %arg5[%c0_34, %c0_35] : memref<2x128xf32, #tpu.memory_space<vmem>>, vector<2x128xf32>
      %cst = arith.constant dense<0xFF800000> : vector<2xf32>
      %91 = vector.multi_reduction <maximumf>, %90, %cst [1] : vector<2x128xf32> to vector<2xf32>
      %92 = vector.shape_cast %91 : vector<2xf32> to vector<2x1xf32>
      %c0_36 = arith.constant 0 : index
      %c0_37 = arith.constant 0 : index
      %93 = vector.load %arg6[%c0_36, %c0_37] : memref<2x128xf32, #tpu.memory_space<vmem>>, vector<2x128xf32>
      %cst_38 = arith.constant dense<0.000000e+00> : vector<2xf32>
      %94 = vector.multi_reduction <add>, %93, %cst_38 [1] : vector<2x128xf32> to vector<2xf32>
      %95 = vector.shape_cast %94 : vector<2xf32> to vector<2x1xf32>
      %cst_39 = arith.constant 9.765625E-4 : f32
      %96 = vector.broadcast %cst_39 : f32 to vector<2x1xf32>
      %97 = arith.mulf %95, %96 : vector<2x1xf32>
      %98 = math.log %92 : vector<2x1xf32>
      %cst_40 = arith.constant 0.434294492 : f32
      %99 = vector.broadcast %cst_40 : f32 to vector<2x1xf32>
      %100 = arith.mulf %98, %99 : vector<2x1xf32>
      %cst_41 = arith.constant 2.000000e+01 : f32
      %101 = vector.broadcast %cst_41 : f32 to vector<2x1xf32>
      %102 = arith.mulf %101, %100 : vector<2x1xf32>
      %103 = math.log %97 : vector<2x1xf32>
      %cst_42 = arith.constant 0.434294492 : f32
      %104 = vector.broadcast %cst_42 : f32 to vector<2x1xf32>
      %105 = arith.mulf %103, %104 : vector<2x1xf32>
      %cst_43 = arith.constant 1.000000e+01 : f32
      %106 = vector.broadcast %cst_43 : f32 to vector<2x1xf32>
      %107 = arith.mulf %106, %105 : vector<2x1xf32>
      %108 = arith.subf %102, %107 : vector<2x1xf32>
      %c0_44 = arith.constant 0 : index
      %c0_45 = arith.constant 0 : index
      %109 = vector.load %arg4[%c0_44, %c0_45] : memref<2x1xf32, #tpu.memory_space<vmem>>, vector<2x1xf32>
      tpu.vector_store %arg4[%c0_44, %c0_45], %108 {strides = array<i32>} : memref<2x1xf32, #tpu.memory_space<vmem>>, vector<2x1xf32>,
    } else {
    }
    return
  }
  func.func @transform_0(%arg0: i32, %arg1: i32) -> (i32, i32) {
    %c0_i32 = arith.constant 0 : i32
    return %arg0, %arg1 : i32, i32
  }
  func.func @transform_1(%arg0: i32, %arg1: i32) -> (i32, i32) {
    %c0_i32 = arith.constant 0 : i32
    return %arg0, %arg1 : i32, i32
  }
  func.func @transform_2(%arg0: i32, %arg1: i32) -> (i32, i32) {
    %c0_i32 = arith.constant 0 : i32
    %c0_i32_0 = arith.constant 0 : i32
    return %arg0, %c0_i32 : i32, i32
  }
}

</mosaic_0001>

<llo_original>
// kernel: tpu_custom_call.1
$region0: #{tpu_custom_call.1}
  #allocation0 [shape = 'u32[]', space=smem, size = 0x4, offset = 0x4, fixed_abs, tag = 'smem constant byte address 0x4 - core index']
  #allocation1 [shape = 'u32[144,128]{1,0:T(1,128)}', space=vmem, size = 0x12000, scoped, tag = 'internal scratch']
  #allocation2 [shape = 'f32[2,128]{1,0:T(2,128)}', space=vmem, size = 0x400, scoped, tag = 'scratch operand']
  #allocation3 [shape = 'f32[2,128]{1,0:T(2,128)}', space=vmem, size = 0x400, scoped, tag = 'scratch operand']
  %s0 = inlined_call_operand.hbm [shape: f32[2,1024], index: 0, kind: input, shape index: {}]
  %s1 = inlined_call_operand.hbm [shape: f32[2,1024], index: 1, kind: input, shape index: {}]
  %s2 = inlined_call_operand.vmem [shape: f32[2,1], index: 2, kind: output, shape index: {}]
  %s3 = sld [smem:[#allocation0]]
  $region34: #{tpu_custom_call.1} parent=0
    _
  %s5 = ssub.s32 1, %s3
  %s6 = scalar_select 0, %s5, %s3
  $region1: #{tpu_custom_call.1} parent=0
    #allocation4 [shape = 'u8[8192]{0}', space=vmem, size = 0x2000, scoped, tag = 'input window, operand 0, single buffered']
    #allocation5 [shape = 's32[1]{0}', space=sflag, size = 0x4, scoped, tag = 'scoped memory for tpu_custom_call.1']
    #allocation6 [shape = 'u8[8192]{0}', space=vmem, size = 0x2000, scoped, tag = 'input window, operand 1, single buffered']
    #allocation7 [shape = 's32[1]{0}', space=sflag, size = 0x4, scoped, tag = 'scoped memory for tpu_custom_call.1']
    %7 = vsyncpa [#allocation5], 0
    %8 = vsyncpa [#allocation7], 0
    // Predicated region
    $region2: #{tpu_custom_call.1} parent=1 // pred_check
      _
    $region3: #{tpu_custom_call.1} parent=1 // pred_check_branch
      %10 = sbr.rel (0) target = $region5
    $region4: #{tpu_custom_call.1} parent=1 // pred_region
      %s12 = ssub.s32 256, 256
      %13 = vsyncadd [#allocation5], %s12
      %s15 = sshll.u32 [#allocation4], 4
      %s16 = int_to_ptr.vmem [resolvable:$true] %s15
      %18 = dma.hbm_to_vmem [thread:$0]  %s0, 256, %s16, [#allocation5]
    $region5: #{tpu_custom_call.1} parent=1 // pred_fallthru
      _
    // Predicated region
    $region6: #{tpu_custom_call.1} parent=1 // pred_check
      _
    $region7: #{tpu_custom_call.1} parent=1 // pred_check_branch
      %20 = sbr.rel (0) target = $region9
    $region8: #{tpu_custom_call.1} parent=1 // pred_region
      %s22 = ssub.s32 256, 256
      %23 = vsyncadd [#allocation7], %s22
      %s25 = sshll.u32 [#allocation6], 4
      %s26 = int_to_ptr.vmem [resolvable:$true] %s25
      %28 = dma.hbm_to_vmem [thread:$0]  %s1, 256, %s26, [#allocation7]
    $region9: #{tpu_custom_call.1} parent=1 // pred_fallthru
      _
    // Predicated region
    $region10: #{tpu_custom_call.1} parent=1 // pred_check
      _
    $region11: #{tpu_custom_call.1} parent=1 // pred_check_branch
      %30 = sbr.rel (0) target = $region13
    $region12: #{tpu_custom_call.1} parent=1 // pred_region
      %31 = dma.done [#allocation5], 256
    $region13: #{tpu_custom_call.1} parent=1 // pred_fallthru
      _
    // Predicated region
    $region14: #{tpu_custom_call.1} parent=1 // pred_check
      _
    $region15: #{tpu_custom_call.1} parent=1 // pred_check_branch
      %33 = sbr.rel (0) target = $region17
    $region16: #{tpu_custom_call.1} parent=1 // pred_region
      %34 = dma.done [#allocation7], 256
    $region17: #{tpu_custom_call.1} parent=1 // pred_fallthru
      _
    %p35 = scmp.eq.s32.totalorder 0, 0
    // Predicated region
    $region18: #{tpu_custom_call.1} parent=1 // pred_check
      %p36 = pneg %p35
    $region19: #{tpu_custom_call.1} parent=1 // pred_check_branch
      %38 = sbr.rel (%p36) target = $region21
    $region20: #{tpu_custom_call.1} parent=1 // pred_region
      %39 = vst [vmem:[#allocation2] sm:$0x3] -inf
      %40 = vst [vmem:[#allocation3] sm:$0x3] 0.0
    $region21: #{tpu_custom_call.1} parent=1 // pred_fallthru
      _
    %v41 = vld [vmem:[#allocation2] sm:$0x3]
    %v42 = vld [vmem:[#allocation3] sm:$0x3]
    %v43 = vld [vmem:[#allocation4] sm:$0x3]
    %v44 = vld [vmem:[#allocation6] sm:$0x3]
    %v45 = vsub.f32 %v43, %v44
    %v46 = vmax.f32 %v41, %v43
    %v47 = vmul.f32 %v45, %v45
    %v48 = vadd.f32 %v42, %v47
    %s49 = scalar_lea.vmem [#allocation4], 2
    %v50 = vld [vmem:[%s49] sm:$0x3]
    %s51 = scalar_lea.vmem [#allocation6], 2
    %v52 = vld [vmem:[%s51] sm:$0x3]
    %v53 = vsub.f32 %v50, %v52
    %v54 = vmax.f32 %v46, %v50
    %v55 = vmul.f32 %v53, %v53
    %v56 = vadd.f32 %v48, %v55
    %s57 = scalar_lea.vmem [#allocation4], 4
    %v58 = vld [vmem:[%s57] sm:$0x3]
    %s59 = scalar_lea.vmem [#allocation6], 4
    %v60 = vld [vmem:[%s59] sm:$0x3]
    %v61 = vsub.f32 %v58, %v60
    %v62 = vmax.f32 %v54, %v58
    %v63 = vmul.f32 %v61, %v61
    %v64 = vadd.f32 %v56, %v63
    %s65 = scalar_lea.vmem [#allocation4], 6
    %v66 = vld [vmem:[%s65] sm:$0x3]
    %s67 = scalar_lea.vmem [#allocation6], 6
    %v68 = vld [vmem:[%s67] sm:$0x3]
    %v69 = vsub.f32 %v66, %v68
    %v70 = vmax.f32 %v62, %v66
    %v71 = vmul.f32 %v69, %v69
    %v72 = vadd.f32 %v64, %v71
    %s73 = scalar_lea.vmem [#allocation4], 8
    %v74 = vld [vmem:[%s73] sm:$0x3]
    %s75 = scalar_lea.vmem [#allocation6], 8
    %v76 = vld [vmem:[%s75] sm:$0x3]
    %v77 = vsub.f32 %v74, %v76
    %v78 = vmax.f32 %v70, %v74
    %v79 = vmul.f32 %v77, %v77
    %v80 = vadd.f32 %v72, %v79
    %s81 = scalar_lea.vmem [#allocation4], 10
    %v82 = vld [vmem:[%s81] sm:$0x3]
    %s83 = scalar_lea.vmem [#allocation6], 10
    %v84 = vld [vmem:[%s83] sm:$0x3]
    %v85 = vsub.f32 %v82, %v84
    %v86 = vmax.f32 %v78, %v82
    %v87 = vmul.f32 %v85, %v85
    %v88 = vadd.f32 %v80, %v87
    %s89 = scalar_lea.vmem [#allocation4], 12
    %v90 = vld [vmem:[%s89] sm:$0x3]
    %s91 = scalar_lea.vmem [#allocation6], 12
    %v92 = vld [vmem:[%s91] sm:$0x3]
    %v93 = vsub.f32 %v90, %v92
    %v94 = vmax.f32 %v86, %v90
    %v95 = vmul.f32 %v93, %v93
    %v96 = vadd.f32 %v88, %v95
    %s97 = scalar_lea.vmem [#allocation4], 14
    %v98 = vld [vmem:[%s97] sm:$0x3]
    %s99 = scalar_lea.vmem [#allocation6], 14
    %v100 = vld [vmem:[%s99] sm:$0x3]
    %v101 = vsub.f32 %v98, %v100
    %v102 = vmax.f32 %v94, %v98
    %v103 = vmul.f32 %v101, %v101
    %v104 = vadd.f32 %v96, %v103
    %105 = vst [vmem:[#allocation2] sm:$0x3] %v102
    %106 = vst [vmem:[#allocation3] sm:$0x3] %v104
    // Predicated region
    $region22: #{tpu_custom_call.1} parent=1 // pred_check
      %p107 = pneg %p35
    $region23: #{tpu_custom_call.1} parent=1 // pred_check_branch
      %109 = sbr.rel (%p107) target = $region25
    $region24: #{tpu_custom_call.1} parent=1 // pred_region
      %v110 = vld [vmem:[#allocation2] sm:$0x3]
      %vm111 = vcmask 1041408
      %v112 = vsel %vm111, %v110, -inf
      %113 = vmax.xlane.f32.xlu0 %v112
      %v114 = vpop.xlane.xlu0 %113
      %v115 = vld [vmem:[#allocation3] sm:$0x3]
      %v116 = vsel %vm111, %v115, 0.0
      %117 = vadd.xlane.f32.xlu0 %v116
      %v118 = vpop.xlane.xlu0 %117
      %v119 = vmul.f32 %v118, 0.0009765625
      %v120 = vlog2.pop %v114
      %v121 = vmul.f32 %v120, 0.6931472
      %v122 = vmul.f32 %v121, 0.4342945
      %v123 = vmul.f32 %v122, 20.0
      %v124 = vlog2.pop %v119
      %v125 = vmul.f32 %v124, 0.6931472
      %v126 = vmul.f32 %v125, 0.4342945
      %v127 = vmul.f32 %v126, 10.0
      %v128 = vsub.f32 %v123, %v127
      %vm129 = vcmask 1024
      %130 = vst.msk [vmem:[%s2] sm:$0x3] %vm129, %v128
    $region25: #{tpu_custom_call.1} parent=1 // pred_fallthru
      _
    // Predicated region
    $region26: #{tpu_custom_call.1} parent=1 // pred_check
      _
    $region27: #{tpu_custom_call.1} parent=1 // pred_check_branch
      %132 = sbr.rel (0) target = $region29
    $region28: #{tpu_custom_call.1} parent=1 // pred_region
      _
    $region29: #{tpu_custom_call.1} parent=1 // pred_fallthru
      _
    // Predicated region
    $region30: #{tpu_custom_call.1} parent=1 // pred_check
      _
    $region31: #{tpu_custom_call.1} parent=1 // pred_check_branch
      %134 = sbr.rel (0) target = $region33
    $region32: #{tpu_custom_call.1} parent=1 // pred_region
      _
    $region33: #{tpu_custom_call.1} parent=1 // pred_fallthru
      _
    %135 = vsyncpa [#allocation5], 1
    %136 = vsyncpa [#allocation7], 1

</llo_original>
